<compile_context>
chip_gen: v7x
topology: tpu7x:2x2x1
jax: 0.10.0
libtpu: 0.0.40
codegen_flags: <defaults>
</compile_context>

<pallas_src>
import functools

import jax
import jax.numpy as jnp
from jax import lax
from jax.experimental import pallas as pl
from jax.experimental.pallas import tpu as pltpu


def _pe_kernel(seed_ref, x_ref, pe_ref, o_ref, *, p, training):
    # x_ref : (Bb, Sb, D) tile of the activations
    # pe_ref: (Sb, D)     matching rows of the positional table (resident across
    #                     the inner batch grid axis)
    y = x_ref[...] + pe_ref[...][None, :, :]  # broadcast add over the Bb axis

    if training and p > 0.0:
        # Counter-based PRNG: per-element tile counter + grid step + seed pushed
        # through a splitmix32-style finalizer.  Pure VPU integer ops -> lowers
        # on both Mosaic and the CPU interpreter (unlike pltpu.prng_*), and the
        # hash decorrelates consecutive grid steps.
        Bb, Sb, D = y.shape
        step = pl.program_id(0) * pl.num_programs(1) + pl.program_id(1)

        i0 = lax.broadcasted_iota(jnp.int32, y.shape, 0).astype(jnp.uint32)
        i1 = lax.broadcasted_iota(jnp.int32, y.shape, 1).astype(jnp.uint32)
        i2 = lax.broadcasted_iota(jnp.int32, y.shape, 2).astype(jnp.uint32)
        idx = i0 * jnp.uint32(Sb * D) + i1 * jnp.uint32(D) + i2
        ctr = idx + jnp.uint32(Bb * Sb * D) * step.astype(jnp.uint32)

        h = ctr ^ (seed_ref[0].astype(jnp.uint32) * jnp.uint32(0x9E3779B9))
        h = (h ^ (h >> jnp.uint32(16))) * jnp.uint32(0x7FEB352D)
        h = (h ^ (h >> jnp.uint32(15))) * jnp.uint32(0x846CA68B)
        h = h ^ (h >> jnp.uint32(16))

        # Signedness-safe compare: keep the top 24 bits (non-negative in int32)
        # and compare against round(p * 2^24).  P(drop) = threshold / 2^24 ~= p.
        r24 = (h >> jnp.uint32(8)).astype(jnp.int32)
        threshold = jnp.int32(min(int(round(p * float(1 << 24))), (1 << 24) - 1))
        keep = r24 >= threshold

        # Inverted dropout.  Scale uses 1/(1-p); actual keep prob differs from
        # (1-p) by < 2^-24 relative -> negligible bias.
        scale = jnp.asarray(1.0 / (1.0 - p), dtype=y.dtype)
        y = jnp.where(keep, y * scale, jnp.zeros_like(y))

    o_ref[...] = y.astype(o_ref.dtype)


def _device_budgets():
    """(block_budget_bytes, vmem_limit_bytes) per TPU generation.

    Kernel is HBM-bandwidth bound; the only tunables are block size (amortizes
    the ~0.35 us/grid-step cost) and the scoped-VMEM limit that must hold
    2x double-buffered (x-in + x-out + pe) blocks plus elementwise temporaries.
    """
    try:
        kind = jax.devices()[0].device_kind.lower()
    except Exception:  # pragma: no cover - no device / interpret environments
        kind = ""
    if "v7" in kind:
        # 64 MiB physical VMEM per TC: stay conservative so compile never fails.
        return 4 << 20, 48 * 1024 * 1024
    if "v5" in kind or "v6" in kind:
        # 128 MiB physical VMEM: big blocks, generous scoped limit.
        return 8 << 20, 96 * 1024 * 1024
    # Unknown backend (e.g. interpreter): small & safe; limit is ignored on CPU.
    return 4 << 20, 32 * 1024 * 1024


def _choose_tiles(B, S, D, itemsize, block_budget):
    """Pick (Bb, Sb) so one (Bb, Sb, D) x-block is ~block_budget bytes, Sb obeys
    the (8,128) block rule, the grid is exact in the batch axis, and (when the
    whole tensor would fit a single block) there are >= 2 grid steps so both
    v7x TensorCores get work."""
    row_bytes = D * itemsize
    max_rows = max(1, block_budget // row_bytes)

    if S <= max_rows:
        Sb = S                                   # full-S tile (== full dim: always legal)
        Bb = max(1, min(B, max_rows // S))
        while B % Bb:                            # exact batch grid, no padded blocks
            Bb -= 1
    else:
        Bb = 1
        cap = max((max_rows // 8) * 8, 8)        # Sb must be a multiple of 8
        Sb = None
        for cand in range(cap, 7, -8):           # prefer an exact divisor of S
            if S % cand == 0:
                Sb = cand
                break
        if Sb is None:
            # No multiple-of-8 divisor (S % 8 != 0): bounded Sb, cdiv grid,
            # Pallas handles the partial last block.  Keeps VMEM predictable.
            Sb = cap

    # Ensure >= 2 grid steps when possible (dual-TC sharding on v7x).
    if pl.cdiv(S, Sb) * (B // Bb) == 1:
        if Bb > 1:
            new_bb = Bb // 2
            while new_bb > 1 and B % new_bb:
                new_bb -= 1
            Bb = max(1, new_bb)
        elif Sb == S and S % 16 == 0:
            Sb = S // 2
    return Bb, Sb


def learnable_positional_encoding(x, pe_table, *, p=0.001, training=False,
                                  seed=0, use_pallas=None):
    """x: (B, S, D); pe_table: (max_len, D).
    Implements LearnablePositionalEncoding.forward: dropout(x + pe[arange(S)])."""
    B, S, D = x.shape
    max_len, D2 = pe_table.shape
    assert D == D2 and S <= max_len
    assert 0.0 <= p < 1.0, "dropout p must be in [0, 1)"

    if use_pallas is None:
        # Eval mode: a plain fused XLA add already hits the HBM roofline, so the
        # pallas_call launch/pipeline cost is pure loss.  Training mode: use the
        # kernel (fused dropout) once there's enough work to amortize overheads.
        use_pallas = training and (B * S * D >= (1 << 20))

    if not use_pallas:
        y = x + pe_table[:S][None, :, :]
        if training and p > 0.0:
            key = jax.random.PRNGKey(seed)
            keep = jax.random.bernoulli(key, 1.0 - p, y.shape)
            y = jnp.where(keep, y * jnp.asarray(1.0 / (1.0 - p), y.dtype),
                          jnp.zeros_like(y))
        return y

    block_budget, vmem_limit = _device_budgets()
    Bb, Sb = _choose_tiles(B, S, D, jnp.dtype(x.dtype).itemsize, block_budget)
    grid = (pl.cdiv(S, Sb), B // Bb)   # s outermost, batch innermost -> pe tile
                                       # resident across the whole batch loop.

    # Avoid a per-call pe_table[:S] HBM copy when S is a multiple of 8 (the
    # BlockSpec already restricts which rows are DMA'd).  Otherwise slice so a
    # full-S block equals the array dim and the (8,128) rule is satisfied.
    pe_in = pe_table if (S % 8 == 0) else pe_table[:S]

    kernel = functools.partial(_pe_kernel, p=float(p), training=bool(training))
    seed_arr = jnp.asarray([seed], dtype=jnp.int32)

    grid_spec = pltpu.PrefetchScalarGridSpec(
        num_scalar_prefetch=1,                                       # seed -> SMEM
        grid=grid,
        in_specs=[
            pl.BlockSpec((Bb, Sb, D), lambda s, b, seed_ref: (b, s, 0)),  # x tile
            pl.BlockSpec((Sb, D),     lambda s, b, seed_ref: (s, 0)),     # pe tile
        ],
        out_specs=pl.BlockSpec((Bb, Sb, D), lambda s, b, seed_ref: (b, s, 0)),
    )

    return pl.pallas_call(
        kernel,
        out_shape=jax.ShapeDtypeStruct((B, S, D), x.dtype),
        grid_spec=grid_spec,
        compiler_params=pltpu.CompilerParams(
            # Both grid axes are independent -> megacore-shardable on v7x
            # (serial-loop no-op on single-TC v5e/v6e).
            dimension_semantics=("parallel", "parallel"),
            vmem_limit_bytes=vmem_limit,
        ),
    )(seed_arr, x, pe_in)


if __name__ == "__main__":
    # Shapes consistent with the module's pos_encoder input: (batch, seq, d_model).
    # embed_size defaults to 256 in TransformerEncoderDecoder_model -> lane-dense.
    B, S, D = 2, 8, 256
    MAX_LEN = 64

    key = jax.random.PRNGKey(0)
    kx, kpe = jax.random.split(key)
    x = jax.random.normal(kx, (B, S, D), dtype=jnp.float32)
    # nn.Embedding default init: N(0, 1)
    pe_table = jax.random.normal(kpe, (MAX_LEN, D), dtype=jnp.float32)

    ref = x + pe_table[:S][None, :, :]

    # Eval-mode forward through the Pallas kernel (forced: auto-dispatch would
    # route shapes this tiny to the plain fused XLA add).
    out = learnable_positional_encoding(x, pe_table, p=0.001, training=False,
                                        use_pallas=True)
    out = jax.block_until_ready(out)
    assert out.shape == (B, S, D)
    assert jnp.allclose(out, ref, atol=1e-6, rtol=1e-6)

    # Training-mode forward exercises the in-kernel (fused) dropout path.
    p = 0.001
    out_tr = learnable_positional_encoding(x, pe_table, p=p, training=True,
                                           seed=123, use_pallas=True)
    out_tr = jax.block_until_ready(out_tr)
    # Every element is either 0 (dropped) or ref / (1 - p) (kept).
    scaled = ref / (1.0 - p)
    kept = out_tr != 0.0
    assert jnp.allclose(jnp.where(kept, out_tr, scaled), scaled,
                        atol=1e-5, rtol=1e-5)
    # Statistical sanity: with p = 0.001 the vast majority of elements are kept.
    assert float(jnp.mean(kept.astype(jnp.float32))) > 0.9

    # Auto-dispatch eval path (XLA fallback) must also match the reference.
    out_eval = jax.block_until_ready(
        learnable_positional_encoding(x, pe_table, p=p, training=False))
    assert jnp.allclose(out_eval, ref, atol=1e-6, rtol=1e-6)

    print("KERNEL_OK")
</pallas_src>

<mosaic_0001>
module attributes {stable_mosaic.version = 11 : i64} {
  func.func @_pe_kernel(%arg0: i32, %arg1: i32, %arg2: memref<1xi32, #tpu.memory_space<smem>>, %arg3: memref<1x8x256xf32, #tpu.memory_space<vmem>>, %arg4: memref<8x256xf32, #tpu.memory_space<vmem>>, %arg5: memref<1x8x256xf32, #tpu.memory_space<vmem>>) attributes {dimension_semantics = [#tpu.dimension_semantics<parallel>, #tpu.dimension_semantics<parallel>], iteration_bounds = array<i64: 1, 2>, scalar_prefetch = 1 : i64, scratch_operands = 0 : i64, tpu.core_type = #tpu.core_type<tc>, window_params = [{transform_indices = @transform_0, window_bounds = array<i64: 1, 8, 256>}, {transform_indices = @transform_1, window_bounds = array<i64: 8, 256>}, {transform_indices = @transform_2, window_bounds = array<i64: 1, 8, 256>}]} {
    %c0 = arith.constant 0 : index
    %c0_0 = arith.constant 0 : index
    %c0_1 = arith.constant 0 : index
    %0 = vector.load %arg3[%c0, %c0_0, %c0_1] : memref<1x8x256xf32, #tpu.memory_space<vmem>>, vector<1x8x256xf32>
    %c0_2 = arith.constant 0 : index
    %c0_3 = arith.constant 0 : index
    %1 = vector.load %arg4[%c0_2, %c0_3] : memref<8x256xf32, #tpu.memory_space<vmem>>, vector<8x256xf32>
    %2 = vector.shape_cast %1 : vector<8x256xf32> to vector<1x8x256xf32>
    %3 = arith.addf %0, %2 : vector<1x8x256xf32>
    %c0_4 = arith.constant 0 : index
    %c0_5 = arith.constant 0 : index
    %c0_6 = arith.constant 0 : index
    %4 = vector.load %arg5[%c0_4, %c0_5, %c0_6] : memref<1x8x256xf32, #tpu.memory_space<vmem>>, vector<1x8x256xf32>
    tpu.vector_store %arg5[%c0_4, %c0_5, %c0_6], %3 {strides = array<i32>} : memref<1x8x256xf32, #tpu.memory_space<vmem>>, vector<1x8x256xf32>,
    return
  }
  func.func @transform_0(%arg0: i32, %arg1: i32, %arg2: memref<1xi32, #tpu.memory_space<smem>>) -> (i32, i32, i32) {
    %c0_i32 = arith.constant 0 : i32
    %c0_i32_0 = arith.constant 0 : i32
    return %arg1, %arg0, %c0_i32 : i32, i32, i32
  }
  func.func @transform_1(%arg0: i32, %arg1: i32, %arg2: memref<1xi32, #tpu.memory_space<smem>>) -> (i32, i32) {
    %c0_i32 = arith.constant 0 : i32
    %c0_i32_0 = arith.constant 0 : i32
    return %arg0, %c0_i32 : i32, i32
  }
  func.func @transform_2(%arg0: i32, %arg1: i32, %arg2: memref<1xi32, #tpu.memory_space<smem>>) -> (i32, i32, i32) {
    %c0_i32 = arith.constant 0 : i32
    %c0_i32_0 = arith.constant 0 : i32
    return %arg1, %arg0, %c0_i32 : i32, i32, i32
  }
}

</mosaic_0001>

<llo_original>
// kernel: tpu_custom_call.1
$region0: #{tpu_custom_call.1}
  #allocation0 [shape = 'u32[]', space=smem, size = 0x4, offset = 0x4, fixed_abs, tag = 'smem constant byte address 0x4 - core index']
  #allocation1 [shape = 'u32[144,128]{1,0:T(1,128)}', space=vmem, size = 0x12000, scoped, tag = 'internal scratch']
  #allocation2 [shape = 's32[1]{0}', space=sflag, size = 0x4, scoped, tag = 'scoped memory for tpu_custom_call.1']
  #allocation3 [shape = 's32[1]{0:T(128)S(6)}', space=smem, size = 0x200, scoped, tag = 'prefetched SMEM operand 0']
  %s0 = inlined_call_operand.<no memory space> [shape: s32[1], index: 0, kind: input, shape index: {}]
  %s1 = inlined_call_operand.hbm [shape: f32[2,8,256], index: 1, kind: input, shape index: {}]
  %s2 = inlined_call_operand.hbm [shape: f32[64,256], index: 2, kind: input, shape index: {}]
  %s3 = inlined_call_operand.hbm [shape: f32[2,8,256], index: 3, kind: output, shape index: {}]
  %s4 = sld [smem:[#allocation0]]
  $region49: #{tpu_custom_call.1} parent=0
    _
  %s6 = ssub.s32 1, %s4
  %s7 = scalar_select 0, %s6, %s4
  %8 = sst [smem:[#allocation3]] %s0
  $region1: #{tpu_custom_call.1} parent=0
    #allocation4 [shape = 'u8[16384]{0}', space=vmem, size = 0x4000, scoped, tag = 'input window, operand 1']
    #allocation5 [shape = 's32[2]{0}', space=sflag, size = 0x8, scoped, tag = 'scoped memory for tpu_custom_call.1']
    #allocation6 [shape = 's32[2]{0}', space=sflag, size = 0x8, scoped, tag = 'scoped memory for tpu_custom_call.1']
    #allocation7 [shape = 'u8[8192]{0}', space=vmem, size = 0x2000, scoped, tag = 'input window, operand 2, single buffered']
    #allocation8 [shape = 's32[1]{0}', space=sflag, size = 0x4, scoped, tag = 'scoped memory for tpu_custom_call.1']
    #allocation9 [shape = 'u8[16384]{0}', space=vmem, size = 0x4000, scoped, tag = 'output window, operand 0']
    %9 = vsyncpa [#allocation5], 0
    %s10 = scalar_lea.sflag [#allocation5], 1
    %11 = vsyncpa %s10, 0
    %12 = vsyncpa [#allocation8], 0
    %13 = vsyncpa [#allocation6], 0
    %s14 = scalar_lea.sflag [#allocation6], 1
    %15 = vsyncpa %s14, 0
    loop: start=0, step=1, limit=4
    $region2: #{tpu_custom_call.1} parent=1 // loop_pre_header
      _
    $region3: #{tpu_custom_call.1} parent=1 // loop_header
      %s17 = sphi 0, %s21
      %p18 = scmp.ge.s32.totalorder %s17, 4
      %s24 = sphi 0, %s36
      %s25 = sphi 0, %s32
      %s26 = sphi 0, %s24
      %s27 = sphi 0, %s25
      %s28 = sphi 0, %s26
      %s29 = sphi 0, %s27
      %s41 = sphi 0, %s43
      %s44 = sphi 0, %s41
      %s45 = sphi 0, %s44
      %s61 = sphi 0, %s45
      %s67 = sphi 0, %s69
      %s70 = sphi 0, %s67
      %s71 = sphi 0, %s70
      %s87 = sphi 0, %s71
      %s95 = sphi 0, %s97
      %s98 = sphi 0, %s95
      %s99 = sphi 0, %s98
      %s115 = sphi 0, %s99
    $region4: #{tpu_custom_call.1} parent=1 // loop_header_branch
      %20 = sbr.rel (%p18) target = $region8
    $region5: #{tpu_custom_call.1} parent=1 // loop_body
      %s22 = ssub.s32 %s17, 1
      %s23 = ssub.s32 %s17, 2
      %s30 = sadd.s32 1, %s25
      %p31 = scmp.ge.s32.totalorder %s30, 2
      %s32 = scalar_select %p31, 0, %s30
      %s33 = sadd.s32 1, %s24
      %s34 = scalar_select %p31, %s33, %s24
      %p35 = scmp.ge.s32.totalorder %s34, 1
      %s36 = scalar_select %p35, 0, %s34
      %s37 = ssub.s32 %s25, %s32
      %s38 = ssub.s32 %s24, %s36
      %s39 = sor.u32 %s37, %s38
      %p40 = scmp.eq.s32.totalorder %s39, 0
      %s42 = sadd.s32 %s41, 1
      %s43 = scalar_select %p40, %s41, %s42
      %p46 = pneg %p40
      %p47 = scmp.eq.s32.totalorder %s17, 1
      %p48 = por %p46, %p47
      %p49 = scmp.ne.s32.totalorder %s41, %s44
      %p50 = scmp.eq.s32.totalorder %s17, 0
      %p51 = por %p49, %p50
      %p52 = scmp.ne.s32.totalorder %s41, %s44
      %p53 = scmp.eq.s32.totalorder %s22, 1
      %p54 = por %p52, %p53
      %p55 = scmp.ne.s32.totalorder %s44, %s45
      %p56 = scmp.eq.s32.totalorder %s22, 0
      %p57 = por %p55, %p56
      %p58 = scmp.ne.s32.totalorder %s44, %s45
      %p59 = scmp.eq.s32.totalorder %s23, 1
      %p60 = por %p58, %p59
      %p62 = scmp.ne.s32.totalorder %s45, %s61
      %p63 = scmp.eq.s32.totalorder %s23, 0
      %p64 = por %p62, %p63
      %s65 = ssub.s32 %s24, %s36
      %p66 = scmp.eq.s32.totalorder %s65, 0
      %s68 = sadd.s32 %s67, 1
      %s69 = scalar_select %p66, %s67, %s68
      %p72 = pneg %p66
      %p73 = scmp.eq.s32.totalorder %s17, 1
      %p74 = por %p72, %p73
      %p75 = scmp.ne.s32.totalorder %s67, %s70
      %p76 = scmp.eq.s32.totalorder %s17, 0
      %p77 = por %p75, %p76
      %p78 = scmp.ne.s32.totalorder %s67, %s70
      %p79 = scmp.eq.s32.totalorder %s22, 1
      %p80 = por %p78, %p79
      %p81 = scmp.ne.s32.totalorder %s70, %s71
      %p82 = scmp.eq.s32.totalorder %s22, 0
      %p83 = por %p81, %p82
      %p84 = scmp.ne.s32.totalorder %s70, %s71
      %p85 = scmp.eq.s32.totalorder %s23, 1
      %p86 = por %p84, %p85
      %p88 = scmp.ne.s32.totalorder %s71, %s87
      %p89 = scmp.eq.s32.totalorder %s23, 0
      %p90 = por %p88, %p89
      %s91 = ssub.s32 %s25, %s32
      %s92 = ssub.s32 %s24, %s36
      %s93 = sor.u32 %s91, %s92
      %p94 = scmp.eq.s32.totalorder %s93, 0
      %s96 = sadd.s32 %s95, 1
      %s97 = scalar_select %p94, %s95, %s96
      %p100 = pneg %p94
      %p101 = scmp.eq.s32.totalorder %s17, 1
      %p102 = por %p100, %p101
      %p103 = scmp.ne.s32.totalorder %s95, %s98
      %p104 = scmp.eq.s32.totalorder %s17, 0
      %p105 = por %p103, %p104
      %p106 = scmp.ne.s32.totalorder %s95, %s98
      %p107 = scmp.eq.s32.totalorder %s22, 1
      %p108 = por %p106, %p107
      %p109 = scmp.ne.s32.totalorder %s98, %s99
      %p110 = scmp.eq.s32.totalorder %s22, 0
      %p111 = por %p109, %p110
      %p112 = scmp.ne.s32.totalorder %s98, %s99
      %p113 = scmp.eq.s32.totalorder %s23, 1
      %p114 = por %p112, %p113
      %p116 = scmp.ne.s32.totalorder %s99, %s115
      %p117 = scmp.eq.s32.totalorder %s23, 0
      %p118 = por %p116, %p117
      %p119 = scmp.le.s32.totalorder 1, %s17
      %p120 = scmp.lt.s32.totalorder %s17, 3
      %p121 = pnand %p119, %p120
      %p122 = pneg %p121
      // Predicated region
      $region9: #{tpu_custom_call.1} parent=5 // pred_check
        _
      $region10: #{tpu_custom_call.1} parent=5 // pred_check_branch
        %124 = sbr.rel (%p121) target = $region12
      $region11: #{tpu_custom_call.1} parent=5 // pred_region
        %s125 = ssub.s32 %s17, 1
        // Predicated region
        $region13: #{tpu_custom_call.1} parent=11 // pred_check
          %p126 = pneg %p83
        $region14: #{tpu_custom_call.1} parent=11 // pred_check_branch
          %128 = sbr.rel (%p126) target = $region16
        $region15: #{tpu_custom_call.1} parent=11 // pred_region
          %s130 = ssub.s32 256, 256
          %131 = vsyncadd [#allocation8], %s130
          %s132 = smul.addr %s26, 2
          %s133 = smul.addr %s132, 128
          %s134 = scalar_lea.hbm %s2, %s133
          %s136 = sshll.u32 [#allocation7], 4
          %s137 = int_to_ptr.vmem [resolvable:$true] %s136
          %139 = dma.hbm_to_vmem [thread:$0]  %s134, 256, %s137, [#allocation8]
        $region16: #{tpu_custom_call.1} parent=11 // pred_fallthru
          _
      $region12: #{tpu_custom_call.1} parent=5 // pred_fallthru
        _
      %p140 = scmp.lt.s32.totalorder %s17, 2
      // Predicated region
      $region17: #{tpu_custom_call.1} parent=5 // pred_check
        %p141 = pneg %p140
      $region18: #{tpu_custom_call.1} parent=5 // pred_check_branch
        %143 = sbr.rel (%p141) target = $region20
      $region19: #{tpu_custom_call.1} parent=5 // pred_region
        // Predicated region
        $region21: #{tpu_custom_call.1} parent=19 // pred_check
          %p144 = pneg %p51
        $region22: #{tpu_custom_call.1} parent=19 // pred_check_branch
          %146 = sbr.rel (%p144) target = $region24
        $region23: #{tpu_custom_call.1} parent=19 // pred_region
          %s147 = sand.u32 %s41, 1
          %s148 = scalar_lea.sflag [#allocation5], %s147
          %s149 = sand.u32 %s41, 1
          %s150 = smul.addr %s149, 16
          %s151 = scalar_lea.vmem [#allocation4], %s150
          %s153 = ssub.s32 256, 256
          %154 = vsyncadd %s148, %s153
          %s155 = smul.addr %s24, 2
          %s156 = smul.addr %s25, 2
          %s157 = sadd.s32 %s155, %s156
          %s158 = smul.addr %s157, 128
          %s159 = scalar_lea.hbm %s1, %s158
          %s161 = sshll.u32 %s151, 4
          %s162 = int_to_ptr.vmem [resolvable:$true] %s161
          %164 = dma.hbm_to_vmem [thread:$0]  %s159, 256, %s162, %s148
        $region24: #{tpu_custom_call.1} parent=19 // pred_fallthru
          _
      $region20: #{tpu_custom_call.1} parent=5 // pred_fallthru
        _
      %p165 = scmp.le.s32.totalorder 1, %s17
      %p166 = scmp.lt.s32.totalorder %s17, 3
      %p167 = pnand %p165, %p166
      %p168 = pneg %p167
      // Predicated region
      $region25: #{tpu_custom_call.1} parent=5 // pred_check
        _
      $region26: #{tpu_custom_call.1} parent=5 // pred_check_branch
        %170 = sbr.rel (%p167) target = $region28
      $region27: #{tpu_custom_call.1} parent=5 // pred_region
        %s171 = ssub.s32 %s17, 1
        %s172 = sand.u32 %s44, 1
        %s173 = scalar_lea.sflag [#allocation5], %s172
        %s174 = sand.u32 %s44, 1
        %s175 = smul.addr %s174, 16
        %s176 = scalar_lea.vmem [#allocation4], %s175
        // Predicated region
        $region29: #{tpu_custom_call.1} parent=27 // pred_check
          %p177 = pneg %p57
        $region30: #{tpu_custom_call.1} parent=27 // pred_check_branch
          %179 = sbr.rel (%p177) target = $region32
        $region31: #{tpu_custom_call.1} parent=27 // pred_region
          %180 = dma.done %s173, 256
        $region32: #{tpu_custom_call.1} parent=27 // pred_fallthru
          _
        // Predicated region
        $region33: #{tpu_custom_call.1} parent=27 // pred_check
          %p181 = pneg %p83
        $region34: #{tpu_custom_call.1} parent=27 // pred_check_branch
          %183 = sbr.rel (%p181) target = $region36
        $region35: #{tpu_custom_call.1} parent=27 // pred_region
          %184 = dma.done [#allocation8], 256
        $region36: #{tpu_custom_call.1} parent=27 // pred_fallthru
          _
        %s185 = sand.u32 %s44, 1
        %s186 = scalar_lea.sflag [#allocation5], %s185
        %s187 = sand.u32 %s44, 1
        %s188 = smul.addr %s187, 16
        %s189 = scalar_lea.vmem [#allocation4], %s188
        %p190 = pneg %p57
        %p191 = pneg %p54
        %p192 = pneg %p83
        %p193 = pneg %p80
        %p194 = pneg %p111
        %p195 = pneg %p108
        %s196 = sand.u32 %s98, 1
        %s197 = scalar_lea.sflag [#allocation6], %s196
        %s198 = sand.u32 %s98, 1
        %s199 = smul.addr %s198, 16
        %s200 = scalar_lea.vmem [#allocation9], %s199
        %v201 = vld [vmem:[%s176] sm:$0xff]
        %v202 = vld [vmem:[%s176 + $0x8] sm:$0xff]
        %v203 = vld [vmem:[#allocation7] sm:$0xff]
        %v204 = vld [vmem:[#allocation7 + $0x8] sm:$0xff]
        %v205 = vadd.f32 %v201, %v203
        %v206 = vadd.f32 %v202, %v204
        %207 = vst [vmem:[%s200] sm:$0xff] %v205
        %208 = vst [vmem:[%s200 + $0x8] sm:$0xff] %v206
        %s209 = sand.u32 %s98, 1
        %s210 = scalar_lea.sflag [#allocation6], %s209
        %s211 = sand.u32 %s98, 1
        %s212 = smul.addr %s211, 16
        %s213 = scalar_lea.vmem [#allocation9], %s212
        // Predicated region
        $region37: #{tpu_custom_call.1} parent=27 // pred_check
          %p214 = pneg %p108
        $region38: #{tpu_custom_call.1} parent=27 // pred_check_branch
          %216 = sbr.rel (%p214) target = $region40
        $region39: #{tpu_custom_call.1} parent=27 // pred_region
          %s218 = ssub.s32 256, 256
          %219 = vsyncadd %s210, %s218
          %s220 = smul.addr %s26, 2
          %s221 = smul.addr %s27, 2
          %s222 = sadd.s32 %s220, %s221
          %s223 = smul.addr %s222, 128
          %s224 = scalar_lea.hbm %s3, %s223
          %s226 = sshll.u32 %s213, 4
          %s227 = int_to_ptr.vmem [resolvable:$true] %s226
          %229 = dma.vmem_to_hbm [thread:$0]  %s227, 256, %s224, %s210
        $region40: #{tpu_custom_call.1} parent=27 // pred_fallthru
          _
      $region28: #{tpu_custom_call.1} parent=5 // pred_fallthru
        _
      %p230 = scmp.le.s32.totalorder 2, %s17
      // Predicated region
      $region41: #{tpu_custom_call.1} parent=5 // pred_check
        %p231 = pneg %p230
      $region42: #{tpu_custom_call.1} parent=5 // pred_check_branch
        %233 = sbr.rel (%p231) target = $region44
      $region43: #{tpu_custom_call.1} parent=5 // pred_region
        %s234 = ssub.s32 %s17, 2
        // Predicated region
        $region45: #{tpu_custom_call.1} parent=43 // pred_check
          %p235 = pneg %p114
        $region46: #{tpu_custom_call.1} parent=43 // pred_check_branch
          %237 = sbr.rel (%p235) target = $region48
        $region47: #{tpu_custom_call.1} parent=43 // pred_region
          %s238 = sand.u32 %s99, 1
          %s239 = scalar_lea.sflag [#allocation6], %s238
          %s240 = sand.u32 %s99, 1
          %s241 = smul.addr %s240, 16
          %s242 = scalar_lea.vmem [#allocation9], %s241
          %243 = dma.done %s239, 256
        $region48: #{tpu_custom_call.1} parent=43 // pred_fallthru
          _
      $region44: #{tpu_custom_call.1} parent=5 // pred_fallthru
        _
    $region6: #{tpu_custom_call.1} parent=1 // loop_footer
      %s21 = sadd.s32 1, %s17
    $region7: #{tpu_custom_call.1} parent=1 // loop_footer_branch
      %16 = sbr.rel target = $region3
    $region8: #{tpu_custom_call.1} parent=1 // loop_exit
      _
    %244 = vsyncpa [#allocation5], 1
    %s245 = scalar_lea.sflag [#allocation5], 1
    %246 = vsyncpa %s245, 1
    %247 = vsyncpa [#allocation8], 1
    %248 = vsyncpa [#allocation6], 1
    %s249 = scalar_lea.sflag [#allocation6], 1
    %250 = vsyncpa %s249, 1

</llo_original>
